<compile_context>
chip_gen: v7x
topology: tpu7x:2x2x1
jax: 0.10.0
libtpu: 0.0.40
codegen_flags: <defaults>
</compile_context>

<pallas_src>
import functools

import jax
import jax.numpy as jnp
from jax.experimental import pallas as pl
from jax.experimental.pallas import tpu as pltpu

_LANE = 128
_SUBLANE = 8


def _normalize_kernel_p2(x_ref, o_ref):
    # Reduce over axis 1 (the channel axis) regardless of block rank.
    x = x_ref[...].astype(jnp.float32)
    ss = jnp.sum(x * x, axis=1, keepdims=True)
    o_ref[...] = (x * jax.lax.rsqrt(ss)).astype(o_ref.dtype)


def _normalize_kernel_general(x_ref, o_ref, *, power):
    # Matches the module's formula (no abs, no eps); root + divide folded into
    # a single EUP pow on the reduced tensor plus one broadcast VPU multiply.
    x = x_ref[...].astype(jnp.float32)
    ss = jnp.sum(x ** power, axis=1, keepdims=True)
    o_ref[...] = (x * (ss ** (-1.0 / power))).astype(o_ref.dtype)


def _cdiv(a, b):
    return -(-a // b)


def _pick_tile(extent, unit_bytes, gran, target_bytes, batch, min_steps=4):
    """Tile size (in units) along the split axis.

    The tile is a multiple of `gran` unless it covers the full extent
    (full-extent block dims are exempt from the (8,128) divisibility rule).
    """
    t = max(gran, (target_bytes // max(unit_bytes, 1)) // gran * gran)
    if t >= extent:
        t = extent
    # Guarantee a few grid steps (when the data allows) so the software
    # pipeline overlaps input/output DMA and the v7x TensorCores split work.
    while batch * _cdiv(extent, t) < min_steps and t > gran:
        halved = max(gran, ((t + 1) // 2) // gran * gran)
        if halved >= t:
            break
        t = halved
    return t


def normalize(x, power=2):
    """L-p normalization over the channel axis (axis 1) of an NCHW tensor."""
    N, C, H, W = x.shape
    HW = H * W
    itemsize = jnp.dtype(x.dtype).itemsize
    sub_mult = max(_SUBLANE, 32 // itemsize)  # dense sublane packing per dtype

    # --- VMEM / tile budget (generation- and dtype-aware) -------------------
    try:
        vmem_cap = int(getattr(pltpu.get_tpu_info(), "vmem_capacity_bytes",
                               64 << 20))
    except Exception:  # pragma: no cover - conservative fallback (v7x size)
        vmem_cap = 64 << 20
    usable = int(vmem_cap * 0.70)
    # Per HBM-block byte: 2 arrays (in+out) x 2 pipeline buffers in the input
    # dtype, plus ~4 block-sized f32 intermediates inside the kernel body.
    per_hbm_byte = 4.0 + 4.0 * (4.0 / itemsize)
    max_block_hbm = int(usable / per_hbm_byte)
    target_block_hbm = min(4 << 20, max_block_hbm)  # ~4 MiB payload per block

    # TODO(synk): for very deep C (>~2k) the minimum block (C x gran x 128)
    # can outgrow the VMEM budget; add a channel-split grid axis ("arbitrary")
    # with a VMEM f32 accumulator + pl.when init/finalize for that regime.

    if power == 2:
        kernel = _normalize_kernel_p2
    else:
        kernel = functools.partial(_normalize_kernel_general, power=power)

    if HW % _LANE == 0:
        # Preferred layout: (N, C, R, 128) — channel axis leading.
        R = HW // _LANE
        unit_bytes = C * _LANE * itemsize            # one 128-lane spatial row
        r_tile = _pick_tile(R, unit_bytes, sub_mult, target_block_hbm, N)
        grid = (N, _cdiv(R, r_tile))
        x_in = x.reshape(N, C, R, _LANE)
        spec = pl.BlockSpec((1, C, r_tile, _LANE), lambda n, j: (n, 0, j, 0))
        out_shape = jax.ShapeDtypeStruct((N, C, R, _LANE), x.dtype)
        block_hbm_bytes = C * r_tile * _LANE * itemsize
    else:
        # Ragged spatial extent: no jnp.pad and no trailing slice (each would
        # be a full extra HBM pass).  Tail-block reads are padded / writes are
        # masked by Pallas; spatial columns are independent so valid outputs
        # are untouched.
        unit_bytes = C * itemsize                    # one spatial column
        hw_tile = _pick_tile(HW, unit_bytes, _LANE, target_block_hbm, N)
        grid = (N, _cdiv(HW, hw_tile))
        x_in = x.reshape(N, C, HW)
        spec = pl.BlockSpec((1, C, hw_tile), lambda n, j: (n, 0, j))
        out_shape = jax.ShapeDtypeStruct((N, C, HW), x.dtype)
        block_hbm_bytes = C * hw_tile * itemsize

    vmem_need = int(per_hbm_byte * block_hbm_bytes) + (8 << 20)
    vmem_limit = max(32 << 20, min(vmem_need, usable))

    out = pl.pallas_call(
        kernel,
        out_shape=out_shape,
        grid_spec=pltpu.PrefetchScalarGridSpec(
            num_scalar_prefetch=0,
            grid=grid,
            in_specs=[spec],
            out_specs=spec,
        ),
        compiler_params=pltpu.CompilerParams(
            dimension_semantics=("parallel", "parallel"),
            vmem_limit_bytes=vmem_limit,
        ),
    )(x_in)

    return out.reshape(N, C, H, W)


def normalize_ref(x, power=2):
    norm = jnp.sum(x ** power, axis=1, keepdims=True) ** (1.0 / power)
    return x / norm


if __name__ == "__main__":
    key = jax.random.PRNGKey(0)

    # Shape consistent with the module's forward (NCHW); HW % 128 == 0 path.
    x = jax.random.normal(key, (2, 4, 16, 16), dtype=jnp.float32)
    out = jax.block_until_ready(normalize(x, power=2))
    ref = normalize_ref(x, power=2)
    assert out.shape == x.shape and out.dtype == x.dtype
    assert jnp.allclose(out, ref, atol=1e-5, rtol=1e-5)

    # Ragged-spatial path (HW % 128 != 0): no pad / slice round-trips.
    x2 = jax.random.normal(jax.random.PRNGKey(0), (2, 4, 7, 7), dtype=jnp.float32)
    out2 = jax.block_until_ready(normalize(x2, power=2))
    assert jnp.allclose(out2, normalize_ref(x2, power=2), atol=1e-5, rtol=1e-5)

    print("KERNEL_OK")
</pallas_src>

<mosaic_0001>
module attributes {stable_mosaic.version = 11 : i64} {
  func.func @_normalize_kernel_p2(%arg0: i32, %arg1: i32, %arg2: memref<1x4x2x128xf32, #tpu.memory_space<vmem>>, %arg3: memref<1x4x2x128xf32, #tpu.memory_space<vmem>>) attributes {dimension_semantics = [#tpu.dimension_semantics<parallel>, #tpu.dimension_semantics<parallel>], iteration_bounds = array<i64: 2, 1>, scalar_prefetch = 0 : i64, scratch_operands = 0 : i64, tpu.core_type = #tpu.core_type<tc>, window_params = [{transform_indices = @transform_0, window_bounds = array<i64: 1, 4, 2, 128>}, {transform_indices = @transform_1, window_bounds = array<i64: 1, 4, 2, 128>}]} {
    %c0 = arith.constant 0 : index
    %c0_0 = arith.constant 0 : index
    %c0_1 = arith.constant 0 : index
    %c0_2 = arith.constant 0 : index
    %0 = vector.load %arg2[%c0, %c0_0, %c0_1, %c0_2] : memref<1x4x2x128xf32, #tpu.memory_space<vmem>>, vector<1x4x2x128xf32>
    %1 = arith.mulf %0, %0 : vector<1x4x2x128xf32>
    %cst = arith.constant dense<0.000000e+00> : vector<1x2x128xf32>
    %2 = vector.multi_reduction <add>, %1, %cst [1] : vector<1x4x2x128xf32> to vector<1x2x128xf32>
    %3 = vector.shape_cast %2 : vector<1x2x128xf32> to vector<1x1x2x128xf32>
    %4 = math.rsqrt %3 : vector<1x1x2x128xf32>
    %5 = vector.broadcast %4 : vector<1x1x2x128xf32> to vector<1x4x2x128xf32>
    %6 = arith.mulf %0, %5 : vector<1x4x2x128xf32>
    %c0_3 = arith.constant 0 : index
    %c0_4 = arith.constant 0 : index
    %c0_5 = arith.constant 0 : index
    %c0_6 = arith.constant 0 : index
    %7 = vector.load %arg3[%c0_3, %c0_4, %c0_5, %c0_6] : memref<1x4x2x128xf32, #tpu.memory_space<vmem>>, vector<1x4x2x128xf32>
    tpu.vector_store %arg3[%c0_3, %c0_4, %c0_5, %c0_6], %6 {strides = array<i32>} : memref<1x4x2x128xf32, #tpu.memory_space<vmem>>, vector<1x4x2x128xf32>,
    return
  }
  func.func @transform_0(%arg0: i32, %arg1: i32) -> (i32, i32, i32, i32) {
    %c0_i32 = arith.constant 0 : i32
    %c0_i32_0 = arith.constant 0 : i32
    %c0_i32_1 = arith.constant 0 : i32
    return %arg0, %c0_i32, %arg1, %c0_i32_0 : i32, i32, i32, i32
  }
  func.func @transform_1(%arg0: i32, %arg1: i32) -> (i32, i32, i32, i32) {
    %c0_i32 = arith.constant 0 : i32
    %c0_i32_0 = arith.constant 0 : i32
    %c0_i32_1 = arith.constant 0 : i32
    return %arg0, %c0_i32, %arg1, %c0_i32_0 : i32, i32, i32, i32
  }
}

</mosaic_0001>

<llo_original>
// kernel: tpu_custom_call.1
$region0: #{tpu_custom_call.1}
  #allocation0 [shape = 'u32[]', space=smem, size = 0x4, offset = 0x4, fixed_abs, tag = 'smem constant byte address 0x4 - core index']
  #allocation1 [shape = 'u32[144,128]{1,0:T(1,128)}', space=vmem, size = 0x12000, scoped, tag = 'internal scratch']
  %s0 = inlined_call_operand.hbm [shape: f32[2,4,2,128], index: 0, kind: input, shape index: {}]
  %s1 = inlined_call_operand.hbm [shape: f32[2,4,2,128], index: 1, kind: output, shape index: {}]
  %s2 = sld [smem:[#allocation0]]
  $region41: #{tpu_custom_call.1} parent=0
    _
  %s4 = ssub.s32 1, %s2
  %s5 = scalar_select 0, %s4, %s2
  $region1: #{tpu_custom_call.1} parent=0
    #allocation2 [shape = 'u8[8192]{0}', space=vmem, size = 0x2000, scoped, tag = 'input window, operand 0']
    #allocation3 [shape = 's32[2]{0}', space=sflag, size = 0x8, scoped, tag = 'scoped memory for tpu_custom_call.1']
    #allocation4 [shape = 's32[2]{0}', space=sflag, size = 0x8, scoped, tag = 'scoped memory for tpu_custom_call.1']
    #allocation5 [shape = 'u8[8192]{0}', space=vmem, size = 0x2000, scoped, tag = 'output window, operand 0']
    %6 = vsyncpa [#allocation3], 0
    %s7 = scalar_lea.sflag [#allocation3], 1
    %8 = vsyncpa %s7, 0
    %9 = vsyncpa [#allocation4], 0
    %s10 = scalar_lea.sflag [#allocation4], 1
    %11 = vsyncpa %s10, 0
    loop: start=0, step=1, limit=4
    $region2: #{tpu_custom_call.1} parent=1 // loop_pre_header
      _
    $region3: #{tpu_custom_call.1} parent=1 // loop_header
      %s13 = sphi 0, %s17
      %p14 = scmp.ge.s32.totalorder %s13, 4
      %s20 = sphi 0, %s32
      %s21 = sphi 0, %s28
      %s22 = sphi 0, %s20
      %s23 = sphi 0, %s21
      %s24 = sphi 0, %s22
      %s25 = sphi 0, %s23
      %s37 = sphi 0, %s39
      %s40 = sphi 0, %s37
      %s41 = sphi 0, %s40
      %s57 = sphi 0, %s41
      %s65 = sphi 0, %s67
      %s68 = sphi 0, %s65
      %s69 = sphi 0, %s68
      %s85 = sphi 0, %s69
    $region4: #{tpu_custom_call.1} parent=1 // loop_header_branch
      %16 = sbr.rel (%p14) target = $region8
    $region5: #{tpu_custom_call.1} parent=1 // loop_body
      %s18 = ssub.s32 %s13, 1
      %s19 = ssub.s32 %s13, 2
      %s26 = sadd.s32 1, %s21
      %p27 = scmp.ge.s32.totalorder %s26, 1
      %s28 = scalar_select %p27, 0, %s26
      %s29 = sadd.s32 1, %s20
      %s30 = scalar_select %p27, %s29, %s20
      %p31 = scmp.ge.s32.totalorder %s30, 2
      %s32 = scalar_select %p31, 0, %s30
      %s33 = ssub.s32 %s20, %s32
      %s34 = ssub.s32 %s21, %s28
      %s35 = sor.u32 %s33, %s34
      %p36 = scmp.eq.s32.totalorder %s35, 0
      %s38 = sadd.s32 %s37, 1
      %s39 = scalar_select %p36, %s37, %s38
      %p42 = pneg %p36
      %p43 = scmp.eq.s32.totalorder %s13, 1
      %p44 = por %p42, %p43
      %p45 = scmp.ne.s32.totalorder %s37, %s40
      %p46 = scmp.eq.s32.totalorder %s13, 0
      %p47 = por %p45, %p46
      %p48 = scmp.ne.s32.totalorder %s37, %s40
      %p49 = scmp.eq.s32.totalorder %s18, 1
      %p50 = por %p48, %p49
      %p51 = scmp.ne.s32.totalorder %s40, %s41
      %p52 = scmp.eq.s32.totalorder %s18, 0
      %p53 = por %p51, %p52
      %p54 = scmp.ne.s32.totalorder %s40, %s41
      %p55 = scmp.eq.s32.totalorder %s19, 1
      %p56 = por %p54, %p55
      %p58 = scmp.ne.s32.totalorder %s41, %s57
      %p59 = scmp.eq.s32.totalorder %s19, 0
      %p60 = por %p58, %p59
      %s61 = ssub.s32 %s20, %s32
      %s62 = ssub.s32 %s21, %s28
      %s63 = sor.u32 %s61, %s62
      %p64 = scmp.eq.s32.totalorder %s63, 0
      %s66 = sadd.s32 %s65, 1
      %s67 = scalar_select %p64, %s65, %s66
      %p70 = pneg %p64
      %p71 = scmp.eq.s32.totalorder %s13, 1
      %p72 = por %p70, %p71
      %p73 = scmp.ne.s32.totalorder %s65, %s68
      %p74 = scmp.eq.s32.totalorder %s13, 0
      %p75 = por %p73, %p74
      %p76 = scmp.ne.s32.totalorder %s65, %s68
      %p77 = scmp.eq.s32.totalorder %s18, 1
      %p78 = por %p76, %p77
      %p79 = scmp.ne.s32.totalorder %s68, %s69
      %p80 = scmp.eq.s32.totalorder %s18, 0
      %p81 = por %p79, %p80
      %p82 = scmp.ne.s32.totalorder %s68, %s69
      %p83 = scmp.eq.s32.totalorder %s19, 1
      %p84 = por %p82, %p83
      %p86 = scmp.ne.s32.totalorder %s69, %s85
      %p87 = scmp.eq.s32.totalorder %s19, 0
      %p88 = por %p86, %p87
      %p89 = scmp.le.s32.totalorder 1, %s13
      %p90 = scmp.lt.s32.totalorder %s13, 3
      %p91 = pnand %p89, %p90
      %p92 = pneg %p91
      // Predicated region
      $region9: #{tpu_custom_call.1} parent=5 // pred_check
        _
      $region10: #{tpu_custom_call.1} parent=5 // pred_check_branch
        %94 = sbr.rel (%p91) target = $region12
      $region11: #{tpu_custom_call.1} parent=5 // pred_region
        %s95 = ssub.s32 %s13, 1
      $region12: #{tpu_custom_call.1} parent=5 // pred_fallthru
        _
      %p96 = scmp.lt.s32.totalorder %s13, 2
      // Predicated region
      $region13: #{tpu_custom_call.1} parent=5 // pred_check
        %p97 = pneg %p96
      $region14: #{tpu_custom_call.1} parent=5 // pred_check_branch
        %99 = sbr.rel (%p97) target = $region16
      $region15: #{tpu_custom_call.1} parent=5 // pred_region
        // Predicated region
        $region17: #{tpu_custom_call.1} parent=15 // pred_check
          %p100 = pneg %p47
        $region18: #{tpu_custom_call.1} parent=15 // pred_check_branch
          %102 = sbr.rel (%p100) target = $region20
        $region19: #{tpu_custom_call.1} parent=15 // pred_region
          %s103 = sand.u32 %s37, 1
          %s104 = scalar_lea.sflag [#allocation3], %s103
          %s105 = sand.u32 %s37, 1
          %s106 = smul.addr %s105, 8
          %s107 = scalar_lea.vmem [#allocation2], %s106
          %s109 = ssub.s32 128, 128
          %110 = vsyncadd %s104, %s109
          %s111 = smul.addr %s20, 4
          %s112 = sadd.s32 %s21, %s111
          %s113 = smul.addr %s112, 32
          %s114 = scalar_lea.hbm %s0, %s113
          %s115 = sshll.u32 %s107, 4
          %s116 = int_to_ptr.vmem [resolvable:$true] %s115
          %121 = dma.hbm_to_vmem [thread:$0]  %s114, 128, %s116, %s104, 32, 32, 2
        $region20: #{tpu_custom_call.1} parent=15 // pred_fallthru
          _
      $region16: #{tpu_custom_call.1} parent=5 // pred_fallthru
        _
      %p122 = scmp.le.s32.totalorder 1, %s13
      %p123 = scmp.lt.s32.totalorder %s13, 3
      %p124 = pnand %p122, %p123
      %p125 = pneg %p124
      // Predicated region
      $region21: #{tpu_custom_call.1} parent=5 // pred_check
        _
      $region22: #{tpu_custom_call.1} parent=5 // pred_check_branch
        %127 = sbr.rel (%p124) target = $region24
      $region23: #{tpu_custom_call.1} parent=5 // pred_region
        %s128 = ssub.s32 %s13, 1
        %s129 = sand.u32 %s40, 1
        %s130 = scalar_lea.sflag [#allocation3], %s129
        %s131 = sand.u32 %s40, 1
        %s132 = smul.addr %s131, 8
        %s133 = scalar_lea.vmem [#allocation2], %s132
        // Predicated region
        $region25: #{tpu_custom_call.1} parent=23 // pred_check
          %p134 = pneg %p53
        $region26: #{tpu_custom_call.1} parent=23 // pred_check_branch
          %136 = sbr.rel (%p134) target = $region28
        $region27: #{tpu_custom_call.1} parent=23 // pred_region
          %137 = dma.done %s130, 128
        $region28: #{tpu_custom_call.1} parent=23 // pred_fallthru
          _
        %s138 = sand.u32 %s40, 1
        %s139 = scalar_lea.sflag [#allocation3], %s138
        %s140 = sand.u32 %s40, 1
        %s141 = smul.addr %s140, 8
        %s142 = scalar_lea.vmem [#allocation2], %s141
        %p143 = pneg %p53
        %p144 = pneg %p50
        %p145 = pneg %p81
        %p146 = pneg %p78
        %s147 = sand.u32 %s68, 1
        %s148 = scalar_lea.sflag [#allocation4], %s147
        %s149 = sand.u32 %s68, 1
        %s150 = smul.addr %s149, 8
        %s151 = scalar_lea.vmem [#allocation5], %s150
        %v152 = vld [vmem:[%s133] sm:$0x3]
        %v153 = vld [vmem:[%s133 + $0x2] sm:$0x3]
        %v154 = vld [vmem:[%s133 + $0x4] sm:$0x3]
        %v155 = vld [vmem:[%s133 + $0x6] sm:$0x3]
        %v156 = vmul.f32 %v152, %v152
        %v157 = vmul.f32 %v153, %v153
        %v158 = vmul.f32 %v154, %v154
        %v159 = vmul.f32 %v155, %v155
        %vm160 = vcmask 1041408
        %v161 = vsel %vm160, %v156, 0.0
        %v162 = vsel %vm160, %v157, 0.0
        %v163 = vadd.f32 %v161, %v162
        %v164 = vsel %vm160, %v158, 0.0
        %v165 = vadd.f32 %v163, %v164
        %v166 = vsel %vm160, %v159, 0.0
        %v167 = vadd.f32 %v165, %v166
        %v168 = vrsqrt.pop %v167
        %v169 = vmul.f32 %v152, %v168
        %v170 = vmul.f32 %v153, %v168
        %v171 = vmul.f32 %v154, %v168
        %v172 = vmul.f32 %v155, %v168
        %173 = vst [vmem:[%s151] sm:$0x3] %v169
        %174 = vst [vmem:[%s151 + $0x2] sm:$0x3] %v170
        %175 = vst [vmem:[%s151 + $0x4] sm:$0x3] %v171
        %176 = vst [vmem:[%s151 + $0x6] sm:$0x3] %v172
        %s177 = sand.u32 %s68, 1
        %s178 = scalar_lea.sflag [#allocation4], %s177
        %s179 = sand.u32 %s68, 1
        %s180 = smul.addr %s179, 8
        %s181 = scalar_lea.vmem [#allocation5], %s180
        // Predicated region
        $region29: #{tpu_custom_call.1} parent=23 // pred_check
          %p182 = pneg %p78
        $region30: #{tpu_custom_call.1} parent=23 // pred_check_branch
          %184 = sbr.rel (%p182) target = $region32
        $region31: #{tpu_custom_call.1} parent=23 // pred_region
          %s186 = ssub.s32 128, 128
          %187 = vsyncadd %s178, %s186
          %s188 = smul.addr %s22, 4
          %s189 = sadd.s32 %s23, %s188
          %s190 = smul.addr %s189, 32
          %s191 = scalar_lea.hbm %s1, %s190
          %s192 = sshll.u32 %s181, 4
          %s193 = int_to_ptr.vmem [resolvable:$true] %s192
          %198 = dma.vmem_to_hbm [thread:$0]  %s193, 128, %s191, %s178, 32, 32, 2
        $region32: #{tpu_custom_call.1} parent=23 // pred_fallthru
          _
      $region24: #{tpu_custom_call.1} parent=5 // pred_fallthru
        _
      %p199 = scmp.le.s32.totalorder 2, %s13
      // Predicated region
      $region33: #{tpu_custom_call.1} parent=5 // pred_check
        %p200 = pneg %p199
      $region34: #{tpu_custom_call.1} parent=5 // pred_check_branch
        %202 = sbr.rel (%p200) target = $region36
      $region35: #{tpu_custom_call.1} parent=5 // pred_region
        %s203 = ssub.s32 %s13, 2
        // Predicated region
        $region37: #{tpu_custom_call.1} parent=35 // pred_check
          %p204 = pneg %p84
        $region38: #{tpu_custom_call.1} parent=35 // pred_check_branch
          %206 = sbr.rel (%p204) target = $region40
        $region39: #{tpu_custom_call.1} parent=35 // pred_region
          %s207 = sand.u32 %s69, 1
          %s208 = scalar_lea.sflag [#allocation4], %s207
          %s209 = sand.u32 %s69, 1
          %s210 = smul.addr %s209, 8
          %s211 = scalar_lea.vmem [#allocation5], %s210
          %212 = dma.done %s208, 128
        $region40: #{tpu_custom_call.1} parent=35 // pred_fallthru
          _
      $region36: #{tpu_custom_call.1} parent=5 // pred_fallthru
        _
    $region6: #{tpu_custom_call.1} parent=1 // loop_footer
      %s17 = sadd.s32 1, %s13
    $region7: #{tpu_custom_call.1} parent=1 // loop_footer_branch
      %12 = sbr.rel target = $region3
    $region8: #{tpu_custom_call.1} parent=1 // loop_exit
      _
    %213 = vsyncpa [#allocation3], 1
    %s214 = scalar_lea.sflag [#allocation3], 1
    %215 = vsyncpa %s214, 1
    %216 = vsyncpa [#allocation4], 1
    %s217 = scalar_lea.sflag [#allocation4], 1
    %218 = vsyncpa %s217, 1

</llo_original>
